<compile_context>
chip_gen: v5e
topology: v5e:2x2
jax: 0.10.0
libtpu: 0.0.40
codegen_flags: <defaults>
</compile_context>

<pallas_src>
import jax
import jax.numpy as jnp
from jax.experimental import pallas as pl
from jax.experimental.pallas import tpu as pltpu

_LOG2 = 0.6931471805599453
_COMPUTE_DTYPE = jnp.bfloat16   # MXU-native operand dtype; accumulation is f32
_ROW_ALIGN = 16                 # sublane alignment for a packed bf16 row tile


def _round_up(x: int, m: int) -> int:
    return (x + m - 1) // m * m


def _make_mlp_kernel(num_linear: int):
    """Fused MLP kernel.

    refs = (x_ref, w0, b0, ..., w_{L-1}, b_{L-1}, out_ref)
      x_ref  : (tile, latent_dim)        bf16 node-feature tile (native width)
      w_i    : (d_i, d_{i+1}_pad)        bf16, pre-transposed to (in, out)
      b_i    : (1, d_{i+1}_pad)          f32 (log2 constant already folded in)
      out_ref: (tile, d_L_pad)           f32 logits tile (lane-dense store)
    """

    def kernel(*refs):
        x_ref = refs[0]
        out_ref = refs[-1]
        params = refs[1:-1]

        h = x_ref[...]                                   # bf16
        for li in range(num_linear):
            w = params[2 * li][...]                      # bf16
            b = params[2 * li + 1][...]                  # f32
            z = jnp.dot(h, w, preferred_element_type=jnp.float32) + b
            if li < num_linear - 1:
                # ssp's "- log(2)" lives in the next layer's bias; only the
                # numerically-stable softplus remains (exp/log1p -> EUP slot).
                a = jnp.maximum(z, 0.0) + jnp.log1p(jnp.exp(-jnp.abs(z)))
                h = a.astype(_COMPUTE_DTYPE)
            else:
                out_ref[...] = z.astype(out_ref.dtype)

    return kernel


def prepare_confidence_head_params(weights, biases, latent_dim):
    """One-time (per model) parameter prep.

    weights[i]: torch-convention (out_i, in_i); biases[i]: (out_i,)
    Validates the layer chain, pre-transposes to (in, out), zero-pads output
    (lane) dims to multiples of 128, folds the ssp "- log(2)" into the bias of
    the consuming layer, and casts weights to bf16 (biases stay f32).

    Returns (packed_params, padded_dims).
    """
    num_linear = len(weights)
    assert len(biases) == num_linear and num_linear >= 1
    dims = [int(latent_dim)] + [int(w.shape[0]) for w in weights]
    for li in range(num_linear):
        assert int(weights[li].shape[1]) == dims[li], (
            f"layer {li}: expected in-dim {dims[li]}, got weight {weights[li].shape}")
        assert int(biases[li].shape[0]) == dims[li + 1], (
            f"layer {li}: bias shape {biases[li].shape} != out-dim {dims[li + 1]}")

    # Output (lane) dims padded to 128; the first layer's K dim stays at the
    # native latent_dim (no lane padding of node_features).
    dims_p = [int(latent_dim)] + [_round_up(d, 128) for d in dims[1:]]

    packed = []
    for li in range(num_linear):
        d_in, d_out = dims_p[li], dims_p[li + 1]
        w_t = jnp.asarray(weights[li], jnp.float32).T          # (in, out)
        b = jnp.asarray(biases[li], jnp.float32)

        w_p = jnp.zeros((d_in, d_out), jnp.float32)
        w_p = w_p.at[: w_t.shape[0], : w_t.shape[1]].set(w_t)
        w_bf = w_p.astype(_COMPUTE_DTYPE)                      # MXU operand

        b_p = jnp.zeros((1, d_out), jnp.float32)
        b_p = b_p.at[0, : b.shape[0]].set(b)
        if li > 0:
            # (softplus(z) - log2) @ W + b == softplus(z) @ W + (b - log2*sum_i W_ij)
            # Padded weight rows/cols are zero, so padded columns keep bias 0.
            col_sum = jnp.sum(w_bf.astype(jnp.float32), axis=0, keepdims=True)
            b_p = b_p - jnp.float32(_LOG2) * col_sum

        packed += [w_bf, b_p]
    return tuple(packed), tuple(dims_p)


def confidence_head_forward(node_features, packed_params, dims_p, num_bins,
                            *, tile_rows: int = 4096):
    """Pallas implementation of ConfidenceHead.forward.

    node_features : (n_atoms, latent_dim) latent vectors from the base model
    packed_params : output of prepare_confidence_head_params (call once per model)
    dims_p        : padded layer dims from prepare_confidence_head_params
    num_bins      : number of confidence bins
    returns       : (n_atoms, num_bins) float32 logits
    """
    # detach_node_features=True -> stop_gradient (forward no-op).
    node_features = jax.lax.stop_gradient(node_features)

    n_atoms, latent_dim = node_features.shape
    assert latent_dim == dims_p[0], (latent_dim, dims_p[0])
    num_linear = len(packed_params) // 2

    # Row tiling: align to bf16 sublane packing; cap the tile so large inputs
    # yield >= ~4 grid steps ("parallel" axis can shard across v7x's 2 TCs).
    n_rows = _round_up(max(n_atoms, 1), _ROW_ALIGN)
    tile = min(_round_up(tile_rows, _ROW_ALIGN), n_rows)
    if n_rows > _ROW_ALIGN:
        tile = min(tile, max(_round_up(pl.cdiv(n_rows, 4), _ROW_ALIGN), _ROW_ALIGN))
    n_pad = _round_up(n_rows, tile)

    # Row-only zero padding (padded rows only ever see biases -> finite, and are
    # sliced off below); bf16 cast; NO lane padding of the latent dim.
    x = jnp.zeros((n_pad, latent_dim), _COMPUTE_DTYPE)
    x = x.at[:n_atoms, :].set(node_features.astype(_COMPUTE_DTYPE))

    # Block whose last dim equals the full array dim is legal even when it is
    # not a multiple of 128.
    in_specs = [pl.BlockSpec((tile, latent_dim), lambda i: (i, 0))]
    for li in range(num_linear):
        d_in, d_out = dims_p[li], dims_p[li + 1]
        # Constant block index -> weights/biases stay VMEM-resident across grid.
        in_specs += [
            pl.BlockSpec((d_in, d_out), lambda i: (0, 0)),
            pl.BlockSpec((1, d_out), lambda i: (0, 0)),
        ]

    out_pad = dims_p[-1]
    out = pl.pallas_call(
        _make_mlp_kernel(num_linear),
        out_shape=jax.ShapeDtypeStruct((n_pad, out_pad), jnp.float32),
        grid=(n_pad // tile,),
        in_specs=in_specs,
        out_specs=pl.BlockSpec((tile, out_pad), lambda i: (i, 0)),
        compiler_params=pltpu.CompilerParams(
            dimension_semantics=("parallel",),    # independent row tiles
            vmem_limit_bytes=32 * 1024 * 1024,    # safe on v5e/v6e/v7x
        ),
    )(x, *packed_params)

    # Padded logit columns are 0.0 (not -inf): always slice before any softmax.
    return out[:n_atoms, :num_bins]


if __name__ == "__main__":
    key = jax.random.PRNGKey(0)

    # Small ConfidenceHead config: latent_dim=32, num_mlp_layers=2,
    # mlp_hidden_dim=32, num_bins=50; 16 atoms in the batch.
    latent_dim = 32
    num_mlp_layers = 2
    mlp_hidden_dim = 32
    num_bins = 50
    n_atoms = 16

    layer_sizes = [latent_dim] + [mlp_hidden_dim] * num_mlp_layers + [num_bins]
    num_linear = len(layer_sizes) - 1
    keys = jax.random.split(key, 2 * num_linear + 1)

    # torch.nn.Linear default init: U(-1/sqrt(fan_in), 1/sqrt(fan_in)).
    weights, biases = [], []
    for i in range(num_linear):
        fan_in, fan_out = layer_sizes[i], layer_sizes[i + 1]
        bound = 1.0 / float(fan_in) ** 0.5
        weights.append(jax.random.uniform(keys[2 * i], (fan_out, fan_in),
                                          minval=-bound, maxval=bound, dtype=jnp.float32))
        biases.append(jax.random.uniform(keys[2 * i + 1], (fan_out,),
                                         minval=-bound, maxval=bound, dtype=jnp.float32))

    node_features = jax.random.normal(keys[-1], (n_atoms, latent_dim), dtype=jnp.float32)

    # Hoisted one-time param prep, then the per-call forward.
    packed, dims_p = prepare_confidence_head_params(weights, biases, latent_dim)
    out = confidence_head_forward(node_features, packed, dims_p, num_bins)
    out = jax.block_until_ready(out)

    # Pure-JAX f32 reference of the original forward semantics.
    h = node_features
    for li in range(num_linear):
        h = h @ weights[li].T + biases[li]
        if li < num_linear - 1:
            h = jax.nn.softplus(h) - jnp.float32(_LOG2)   # 'ssp' activation
    ref = h

    assert out.shape == (n_atoms, num_bins), out.shape
    assert bool(jnp.all(jnp.isfinite(out))), "non-finite logits"
    max_err = float(jnp.max(jnp.abs(out - ref)))
    # bf16 matmul datapath vs f32 reference: tolerance sized for bf16 rounding.
    assert max_err < 5e-2, f"max abs err {max_err}"

    print("KERNEL_OK")
</pallas_src>

<mosaic_0001>
module attributes {stable_mosaic.version = 11 : i64} {
  func.func @kernel(%arg0: i32, %arg1: memref<16x32xbf16, #tpu.memory_space<vmem>>, %arg2: memref<32x128xbf16, #tpu.memory_space<vmem>>, %arg3: memref<1x128xf32, #tpu.memory_space<vmem>>, %arg4: memref<128x128xbf16, #tpu.memory_space<vmem>>, %arg5: memref<1x128xf32, #tpu.memory_space<vmem>>, %arg6: memref<128x128xbf16, #tpu.memory_space<vmem>>, %arg7: memref<1x128xf32, #tpu.memory_space<vmem>>, %arg8: memref<16x128xf32, #tpu.memory_space<vmem>>) attributes {dimension_semantics = [#tpu.dimension_semantics<parallel>], iteration_bounds = array<i64: 1>, scalar_prefetch = 0 : i64, scratch_operands = 0 : i64, tpu.core_type = #tpu.core_type<tc>, window_params = [{transform_indices = @transform_0, window_bounds = array<i64: 16, 32>}, {pipeline_mode = #tpu.pipeline_mode<synchronous>, transform_indices = @transform_1, window_bounds = array<i64: 32, 128>}, {pipeline_mode = #tpu.pipeline_mode<synchronous>, transform_indices = @transform_2, window_bounds = array<i64: 1, 128>}, {pipeline_mode = #tpu.pipeline_mode<synchronous>, transform_indices = @transform_3, window_bounds = array<i64: 128, 128>}, {pipeline_mode = #tpu.pipeline_mode<synchronous>, transform_indices = @transform_4, window_bounds = array<i64: 1, 128>}, {pipeline_mode = #tpu.pipeline_mode<synchronous>, transform_indices = @transform_5, window_bounds = array<i64: 128, 128>}, {pipeline_mode = #tpu.pipeline_mode<synchronous>, transform_indices = @transform_6, window_bounds = array<i64: 1, 128>}, {transform_indices = @transform_7, window_bounds = array<i64: 16, 128>}]} {
    %c0 = arith.constant 0 : index
    %c0_0 = arith.constant 0 : index
    %0 = vector.load %arg1[%c0, %c0_0] : memref<16x32xbf16, #tpu.memory_space<vmem>>, vector<16x32xbf16>
    %c0_1 = arith.constant 0 : index
    %c0_2 = arith.constant 0 : index
    %1 = vector.load %arg2[%c0_1, %c0_2] : memref<32x128xbf16, #tpu.memory_space<vmem>>, vector<32x128xbf16>
    %c0_3 = arith.constant 0 : index
    %c0_4 = arith.constant 0 : index
    %2 = vector.load %arg3[%c0_3, %c0_4] : memref<1x128xf32, #tpu.memory_space<vmem>>, vector<1x128xf32>
    %cst = arith.constant dense<0.000000e+00> : vector<16x128xf32>
    %3 = tpu.matmul %0, %1, %cst {dimension_numbers = #tpu.dot_dimension_numbers<[1], [0], [0], [1], [0, 0, 1, 1], [], []>} : vector<16x32xbf16>, vector<32x128xbf16>, vector<16x128xf32> -> vector<16x128xf32>
    %4 = vector.broadcast %2 : vector<1x128xf32> to vector<16x128xf32>
    %5 = arith.addf %3, %4 : vector<16x128xf32>
    %cst_5 = arith.constant 0.000000e+00 : f32
    %6 = vector.broadcast %cst_5 : f32 to vector<16x128xf32>
    %7 = arith.maximumf %5, %6 : vector<16x128xf32>
    %8 = math.absf %5 : vector<16x128xf32>
    %cst_6 = arith.constant 0.000000e+00 : f32
    %9 = vector.broadcast %cst_6 : f32 to vector<16x128xf32>
    %10 = arith.subf %9, %8 : vector<16x128xf32>
    %11 = math.exp %10 : vector<16x128xf32>
    %12 = math.log1p %11 : vector<16x128xf32>
    %13 = arith.addf %7, %12 : vector<16x128xf32>
    %14 = arith.truncf %13 : vector<16x128xf32> to vector<16x128xbf16>
    %c0_7 = arith.constant 0 : index
    %c0_8 = arith.constant 0 : index
    %15 = vector.load %arg4[%c0_7, %c0_8] : memref<128x128xbf16, #tpu.memory_space<vmem>>, vector<128x128xbf16>
    %c0_9 = arith.constant 0 : index
    %c0_10 = arith.constant 0 : index
    %16 = vector.load %arg5[%c0_9, %c0_10] : memref<1x128xf32, #tpu.memory_space<vmem>>, vector<1x128xf32>
    %cst_11 = arith.constant dense<0.000000e+00> : vector<16x128xf32>
    %17 = tpu.matmul %14, %15, %cst_11 {dimension_numbers = #tpu.dot_dimension_numbers<[1], [0], [0], [1], [0, 0, 1, 1], [], []>} : vector<16x128xbf16>, vector<128x128xbf16>, vector<16x128xf32> -> vector<16x128xf32>
    %18 = vector.broadcast %16 : vector<1x128xf32> to vector<16x128xf32>
    %19 = arith.addf %17, %18 : vector<16x128xf32>
    %cst_12 = arith.constant 0.000000e+00 : f32
    %20 = vector.broadcast %cst_12 : f32 to vector<16x128xf32>
    %21 = arith.maximumf %19, %20 : vector<16x128xf32>
    %22 = math.absf %19 : vector<16x128xf32>
    %cst_13 = arith.constant 0.000000e+00 : f32
    %23 = vector.broadcast %cst_13 : f32 to vector<16x128xf32>
    %24 = arith.subf %23, %22 : vector<16x128xf32>
    %25 = math.exp %24 : vector<16x128xf32>
    %26 = math.log1p %25 : vector<16x128xf32>
    %27 = arith.addf %21, %26 : vector<16x128xf32>
    %28 = arith.truncf %27 : vector<16x128xf32> to vector<16x128xbf16>
    %c0_14 = arith.constant 0 : index
    %c0_15 = arith.constant 0 : index
    %29 = vector.load %arg6[%c0_14, %c0_15] : memref<128x128xbf16, #tpu.memory_space<vmem>>, vector<128x128xbf16>
    %c0_16 = arith.constant 0 : index
    %c0_17 = arith.constant 0 : index
    %30 = vector.load %arg7[%c0_16, %c0_17] : memref<1x128xf32, #tpu.memory_space<vmem>>, vector<1x128xf32>
    %cst_18 = arith.constant dense<0.000000e+00> : vector<16x128xf32>
    %31 = tpu.matmul %28, %29, %cst_18 {dimension_numbers = #tpu.dot_dimension_numbers<[1], [0], [0], [1], [0, 0, 1, 1], [], []>} : vector<16x128xbf16>, vector<128x128xbf16>, vector<16x128xf32> -> vector<16x128xf32>
    %32 = vector.broadcast %30 : vector<1x128xf32> to vector<16x128xf32>
    %33 = arith.addf %31, %32 : vector<16x128xf32>
    %c0_19 = arith.constant 0 : index
    %c0_20 = arith.constant 0 : index
    %34 = vector.load %arg8[%c0_19, %c0_20] : memref<16x128xf32, #tpu.memory_space<vmem>>, vector<16x128xf32>
    tpu.vector_store %arg8[%c0_19, %c0_20], %33 {strides = array<i32>} : memref<16x128xf32, #tpu.memory_space<vmem>>, vector<16x128xf32>,
    return
  }
  func.func @transform_0(%arg0: i32) -> (i32, i32) {
    %c0_i32 = arith.constant 0 : i32
    %c0_i32_0 = arith.constant 0 : i32
    return %arg0, %c0_i32 : i32, i32
  }
  func.func @transform_1(%arg0: i32) -> (i32, i32) {
    %c0_i32 = arith.constant 0 : i32
    %c0_i32_0 = arith.constant 0 : i32
    %c0_i32_1 = arith.constant 0 : i32
    return %c0_i32, %c0_i32_0 : i32, i32
  }
  func.func @transform_2(%arg0: i32) -> (i32, i32) {
    %c0_i32 = arith.constant 0 : i32
    %c0_i32_0 = arith.constant 0 : i32
    %c0_i32_1 = arith.constant 0 : i32
    return %c0_i32, %c0_i32_0 : i32, i32
  }
  func.func @transform_3(%arg0: i32) -> (i32, i32) {
    %c0_i32 = arith.constant 0 : i32
    %c0_i32_0 = arith.constant 0 : i32
    %c0_i32_1 = arith.constant 0 : i32
    return %c0_i32, %c0_i32_0 : i32, i32
  }
  func.func @transform_4(%arg0: i32) -> (i32, i32) {
    %c0_i32 = arith.constant 0 : i32
    %c0_i32_0 = arith.constant 0 : i32
    %c0_i32_1 = arith.constant 0 : i32
    return %c0_i32, %c0_i32_0 : i32, i32
  }
  func.func @transform_5(%arg0: i32) -> (i32, i32) {
    %c0_i32 = arith.constant 0 : i32
    %c0_i32_0 = arith.constant 0 : i32
    %c0_i32_1 = arith.constant 0 : i32
    return %c0_i32, %c0_i32_0 : i32, i32
  }
  func.func @transform_6(%arg0: i32) -> (i32, i32) {
    %c0_i32 = arith.constant 0 : i32
    %c0_i32_0 = arith.constant 0 : i32
    %c0_i32_1 = arith.constant 0 : i32
    return %c0_i32, %c0_i32_0 : i32, i32
  }
  func.func @transform_7(%arg0: i32) -> (i32, i32) {
    %c0_i32 = arith.constant 0 : i32
    %c0_i32_0 = arith.constant 0 : i32
    return %arg0, %c0_i32 : i32, i32
  }
}

</mosaic_0001>

<llo_original>
// kernel: tpu_custom_call.1
$region0: #{tpu_custom_call.1}
  #allocation0 [shape = 'u32[]', space=smem, size = 0x4, offset = 0x4, fixed_abs, tag = 'smem constant byte address 0x4 - core index']
  #allocation1 [shape = 'u32[72,128]{1,0:T(1,128)}', space=vmem, size = 0x9000, scoped, tag = 'internal scratch']
  %s0 = inlined_call_operand.hbm [shape: bf16[16,32], index: 0, kind: input, shape index: {}]
  %s1 = inlined_call_operand.hbm [shape: bf16[32,128], index: 1, kind: input, shape index: {}]
  %s2 = inlined_call_operand.vmem [shape: f32[1,128], index: 2, kind: input, shape index: {}]
  %s3 = inlined_call_operand.hbm [shape: bf16[128,128], index: 3, kind: input, shape index: {}]
  %s4 = inlined_call_operand.vmem [shape: f32[1,128], index: 4, kind: input, shape index: {}]
  %s5 = inlined_call_operand.hbm [shape: bf16[128,128], index: 5, kind: input, shape index: {}]
  %s6 = inlined_call_operand.vmem [shape: f32[1,128], index: 6, kind: input, shape index: {}]
  %s7 = inlined_call_operand.hbm [shape: f32[16,128], index: 7, kind: output, shape index: {}]
  %s8 = sld [smem:[#allocation0]]
  $region54: #{tpu_custom_call.1} parent=0
    _
  %s10 = ssub.s32 1, %s8
  %s11 = scalar_select 0, %s10, %s8
  $region1: #{tpu_custom_call.1} parent=0
    #allocation2 [shape = 'u8[4096]{0}', space=vmem, size = 0x1000, scoped, tag = 'input window, operand 0, single buffered']
    #allocation3 [shape = 's32[1]{0}', space=sflag, size = 0x4, scoped, tag = 'scoped memory for tpu_custom_call.1']
    #allocation4 [shape = 's32[1]{0}', space=sflag, size = 0x4, scoped, tag = 'scoped memory for tpu_custom_call.1']
    #allocation5 [shape = 'u8[8192]{0}', space=vmem, size = 0x2000, scoped, tag = 'input window, operand 1, single buffered']
    #allocation6 [shape = 's32[1]{0}', space=sflag, size = 0x4, scoped, tag = 'scoped memory for tpu_custom_call.1']
    #allocation7 [shape = 'u8[32768]{0}', space=vmem, size = 0x8000, scoped, tag = 'input window, operand 3, single buffered']
    #allocation8 [shape = 'u8[32768]{0}', space=vmem, size = 0x8000, scoped, tag = 'input window, operand 5, single buffered']
    #allocation9 [shape = 's32[1]{0}', space=sflag, size = 0x4, scoped, tag = 'scoped memory for tpu_custom_call.1']
    #allocation10 [shape = 'u8[8192]{0}', space=vmem, size = 0x2000, scoped, tag = 'output window, operand 0, single buffered']
    %12 = vsyncpa [#allocation3], 0
    %13 = vsyncpa [#allocation6], 0
    %14 = vsyncpa [#allocation9], 0
    %15 = vsyncpa [#allocation4], 0
    // Predicated region
    $region2: #{tpu_custom_call.1} parent=1 // pred_check
      _
    $region3: #{tpu_custom_call.1} parent=1 // pred_check_branch
      %17 = sbr.rel (0) target = $region5
    $region4: #{tpu_custom_call.1} parent=1 // pred_region
      %19 = vsyncadd [#allocation3], 0
      %s20 = sshll.u32 %s0, 4
      %s21 = int_to_ptr.hbm [resolvable:$true] %s20
      %s22 = sshll.u32 [#allocation2], 4
      %s23 = int_to_ptr.vmem [resolvable:$true] %s22
      %28 = dma.hbm_to_vmem [thread:$0]  %s21, 128, %s23, [#allocation3], 64, 64, 4
    $region5: #{tpu_custom_call.1} parent=1 // pred_fallthru
      _
    // Predicated region
    $region6: #{tpu_custom_call.1} parent=1 // pred_check
      _
    $region7: #{tpu_custom_call.1} parent=1 // pred_check_branch
      %30 = sbr.rel (0) target = $region9
    $region8: #{tpu_custom_call.1} parent=1 // pred_region
      %32 = vsyncadd [#allocation6], 0
      %s33 = sshll.u32 %s1, 4
      %s34 = int_to_ptr.hbm [resolvable:$true] %s33
      %s35 = sshll.u32 [#allocation5], 4
      %s36 = int_to_ptr.vmem [resolvable:$true] %s35
      %41 = dma.hbm_to_vmem [thread:$0]  %s34, 256, %s36, [#allocation6], 64, 64, 4
    $region9: #{tpu_custom_call.1} parent=1 // pred_fallthru
      _
    // Predicated region
    $region10: #{tpu_custom_call.1} parent=1 // pred_check
      _
    $region11: #{tpu_custom_call.1} parent=1 // pred_check_branch
      %43 = sbr.rel (0) target = $region13
    $region12: #{tpu_custom_call.1} parent=1 // pred_region
      _
    $region13: #{tpu_custom_call.1} parent=1 // pred_fallthru
      _
    // Predicated region
    $region14: #{tpu_custom_call.1} parent=1 // pred_check
      _
    $region15: #{tpu_custom_call.1} parent=1 // pred_check_branch
      %45 = sbr.rel (0) target = $region17
    $region16: #{tpu_custom_call.1} parent=1 // pred_region
      %47 = vsyncadd [#allocation6], 0
      %s48 = sshll.u32 %s3, 4
      %s49 = int_to_ptr.hbm [resolvable:$true] %s48
      %s50 = sshll.u32 [#allocation7], 4
      %s51 = int_to_ptr.vmem [resolvable:$true] %s50
      %56 = dma.hbm_to_vmem [thread:$0]  %s49, 1024, %s51, [#allocation6], 64, 64, 4
    $region17: #{tpu_custom_call.1} parent=1 // pred_fallthru
      _
    // Predicated region
    $region18: #{tpu_custom_call.1} parent=1 // pred_check
      _
    $region19: #{tpu_custom_call.1} parent=1 // pred_check_branch
      %58 = sbr.rel (0) target = $region21
    $region20: #{tpu_custom_call.1} parent=1 // pred_region
      _
    $region21: #{tpu_custom_call.1} parent=1 // pred_fallthru
      _
    // Predicated region
    $region22: #{tpu_custom_call.1} parent=1 // pred_check
      _
    $region23: #{tpu_custom_call.1} parent=1 // pred_check_branch
      %60 = sbr.rel (0) target = $region25
    $region24: #{tpu_custom_call.1} parent=1 // pred_region
      %62 = vsyncadd [#allocation9], 0
      %s63 = sshll.u32 %s5, 4
      %s64 = int_to_ptr.hbm [resolvable:$true] %s63
      %s65 = sshll.u32 [#allocation8], 4
      %s66 = int_to_ptr.vmem [resolvable:$true] %s65
      %71 = dma.hbm_to_vmem [thread:$0]  %s64, 1024, %s66, [#allocation9], 64, 64, 4
    $region25: #{tpu_custom_call.1} parent=1 // pred_fallthru
      _
    // Predicated region
    $region26: #{tpu_custom_call.1} parent=1 // pred_check
      _
    $region27: #{tpu_custom_call.1} parent=1 // pred_check_branch
      %73 = sbr.rel (0) target = $region29
    $region28: #{tpu_custom_call.1} parent=1 // pred_region
      _
    $region29: #{tpu_custom_call.1} parent=1 // pred_fallthru
      _
    // Predicated region
    $region30: #{tpu_custom_call.1} parent=1 // pred_check
      _
    $region31: #{tpu_custom_call.1} parent=1 // pred_check_branch
      %75 = sbr.rel (0) target = $region33
    $region32: #{tpu_custom_call.1} parent=1 // pred_region
      %77 = dma.done [#allocation3], 128
    $region33: #{tpu_custom_call.1} parent=1 // pred_fallthru
      _
    // Predicated region
    $region34: #{tpu_custom_call.1} parent=1 // pred_check
      _
    $region35: #{tpu_custom_call.1} parent=1 // pred_check_branch
      %79 = sbr.rel (0) target = $region37
    $region36: #{tpu_custom_call.1} parent=1 // pred_region
      %81 = dma.done [#allocation6], 256
    $region37: #{tpu_custom_call.1} parent=1 // pred_fallthru
      _
    // Predicated region
    $region38: #{tpu_custom_call.1} parent=1 // pred_check
      _
    $region39: #{tpu_custom_call.1} parent=1 // pred_check_branch
      %83 = sbr.rel (0) target = $region41
    $region40: #{tpu_custom_call.1} parent=1 // pred_region
      %85 = dma.done [#allocation6], 1024
    $region41: #{tpu_custom_call.1} parent=1 // pred_fallthru
      _
    // Predicated region
    $region42: #{tpu_custom_call.1} parent=1 // pred_check
      _
    $region43: #{tpu_custom_call.1} parent=1 // pred_check_branch
      %87 = sbr.rel (0) target = $region45
    $region44: #{tpu_custom_call.1} parent=1 // pred_region
      %89 = dma.done [#allocation9], 1024
    $region45: #{tpu_custom_call.1} parent=1 // pred_fallthru
      _
    %v91 = vld [vmem:[#allocation2] sm:$0xf]
    %v92 = vld [vmem:[#allocation2 + $0x4] sm:$0xf]
    %v93 = vld [vmem:[#allocation5] sm:$0xf]
    %v94 = vld [vmem:[#allocation5 + $0x4] sm:$0xf]
    %v95 = vld [vmem:[#allocation5 + $0x8] sm:$0xf]
    %v96 = vld [vmem:[#allocation5 + $0xc] sm:$0xf]
    %v97 = vld [vmem:[%s2] sm:$0x1]
    %v99 = vperm.slane %v97, 0
    %v103 = vunpack.c.l.b16 %v91
    %v104 = vunpack.c.l.b16 %v92
    %v105 = vpack.c.b16 %v104, %v103
    %v110 = vunpack.c.l.b16 %v93
    %v111 = vunpack.c.l.b16 %v94
    %v112 = vunpack.c.l.b16 %v95
    %v113 = vunpack.c.l.b16 %v96
    %v114 = vpack.c.b16 %v111, %v110
    %v115 = vpack.c.b16 %v113, %v112
    %vm118 = vcmask 261120
    %v120 = vsel %vm118, %v105, 0
    %122 = vmatpush.bf16.msra.mxu0 0
    %123 = vmatpush.bf16.msra.mxu0 0
    %124 = vmatpush.bf16.msra.mxu0 0
    %125 = vmatpush.bf16.msra.mxu0 0
    %126 = vmatpush.bf16.msra.mxu0 0
    %127 = vmatpush.bf16.msra.mxu0 0
    %128 = vmatpush.bf16.msra.mxu0 %v115
    %129 = vmatpush.bf16.msra.mxu0 %v114
    %130 = vmatmul.bf16.gmra.mxu0 %v120
    %v131 = vpop.f32.mrf.mxu0
    %v132 = vadd.f32 %v99, %v131
    %v133 = vpop.f32.mrf.mxu0
    %v134 = vadd.f32 %v99, %v133
    %135 = vdwg.mxu0
    %v136 = vmax.f32 %v132, 0.0
    %v137 = vmax.f32 %v134, 0.0
    %v138 = vand.u32 2147483647, %v132
    %v139 = vand.u32 2147483647, %v134
    %v140 = vsub.f32 0.0, %v138
    %v141 = vsub.f32 0.0, %v139
    %v142 = vmul.f32 %v140, 1.442695
    %v143 = vpow.pop %v142
    %v144 = vmul.f32 %v141, 1.442695
    %v145 = vpow.pop %v144
    %v146 = vadd.f32 %v143, 1.0
    %v147 = vlog2.pop %v146
    %v148 = vmul.f32 %v147, 0.6931472
    %v149 = vmul.f32 -0.5, %v143
    %v150 = vadd.f32 %v149, 1.0
    %v151 = vmul.f32 %v150, %v143
    %v152 = vand.u32 2147483647, %v143
    %vm153 = vcmp.lt.f32.partialorder %v152, 0.0004427343
    %v154 = vsel %vm153, %v151, %v148
    %v155 = vadd.f32 %v145, 1.0
    %v156 = vlog2.pop %v155
    %v157 = vmul.f32 %v156, 0.6931472
    %v158 = vmul.f32 -0.5, %v145
    %v159 = vadd.f32 %v158, 1.0
    %v160 = vmul.f32 %v159, %v145
    %v161 = vand.u32 2147483647, %v145
    %vm162 = vcmp.lt.f32.partialorder %v161, 0.0004427343
    %v163 = vsel %vm162, %v160, %v157
    %v164 = vadd.f32 %v136, %v154
    %v165 = vadd.f32 %v137, %v163
    %v166 = vpack.c.bf16 %v165, %v164
    %v167 = vld [vmem:[#allocation7] sm:$0xf]
    %v168 = vld [vmem:[#allocation7 + $0x4] sm:$0xf]
    %v169 = vld [vmem:[#allocation7 + $0x8] sm:$0xf]
    %v170 = vld [vmem:[#allocation7 + $0xc] sm:$0xf]
    %v171 = vld [vmem:[#allocation7 + $0x10] sm:$0xf]
    %v172 = vld [vmem:[#allocation7 + $0x14] sm:$0xf]
    %v173 = vld [vmem:[#allocation7 + $0x18] sm:$0xf]
    %v174 = vld [vmem:[#allocation7 + $0x1c] sm:$0xf]
    %v175 = vld [vmem:[#allocation7 + $0x20] sm:$0xf]
    %v176 = vld [vmem:[#allocation7 + $0x24] sm:$0xf]
    %v177 = vld [vmem:[#allocation7 + $0x28] sm:$0xf]
    %v178 = vld [vmem:[#allocation7 + $0x2c] sm:$0xf]
    %v179 = vld [vmem:[#allocation7 + $0x30] sm:$0xf]
    %v180 = vld [vmem:[#allocation7 + $0x34] sm:$0xf]
    %v181 = vld [vmem:[#allocation7 + $0x38] sm:$0xf]
    %v182 = vld [vmem:[#allocation7 + $0x3c] sm:$0xf]
    %v183 = vld [vmem:[%s4] sm:$0x1]
    %v185 = vperm.slane %v183, 0
    %v203 = vunpack.c.l.b16 %v167
    %v204 = vunpack.c.l.b16 %v168
    %v205 = vunpack.c.l.b16 %v169
    %v206 = vunpack.c.l.b16 %v170
    %v207 = vunpack.c.l.b16 %v171
    %v208 = vunpack.c.l.b16 %v172
    %v209 = vunpack.c.l.b16 %v173
    %v210 = vunpack.c.l.b16 %v174
    %v211 = vunpack.c.l.b16 %v175
    %v212 = vunpack.c.l.b16 %v176
    %v213 = vunpack.c.l.b16 %v177
    %v214 = vunpack.c.l.b16 %v178
    %v215 = vunpack.c.l.b16 %v179
    %v216 = vunpack.c.l.b16 %v180
    %v217 = vunpack.c.l.b16 %v181
    %v218 = vunpack.c.l.b16 %v182
    %v219 = vpack.c.b16 %v204, %v203
    %v220 = vpack.c.b16 %v206, %v205
    %v221 = vpack.c.b16 %v208, %v207
    %v222 = vpack.c.b16 %v210, %v209
    %v223 = vpack.c.b16 %v212, %v211
    %v224 = vpack.c.b16 %v214, %v213
    %v225 = vpack.c.b16 %v216, %v215
    %v226 = vpack.c.b16 %v218, %v217
    %235 = vmatpush.bf16.msra.mxu0 %v226
    %236 = vmatpush.bf16.msra.mxu0 %v225
    %237 = vmatpush.bf16.msra.mxu0 %v224
    %238 = vmatpush.bf16.msra.mxu0 %v223
    %239 = vmatpush.bf16.msra.mxu0 %v222
    %240 = vmatpush.bf16.msra.mxu0 %v221
    %241 = vmatpush.bf16.msra.mxu0 %v220
    %242 = vmatpush.bf16.msra.mxu0 %v219
    %243 = vmatmul.bf16.gmra.mxu0 %v166
    %v244 = vpop.f32.mrf.mxu0
    %v245 = vadd.f32 %v185, %v244
    %v246 = vpop.f32.mrf.mxu0
    %v247 = vadd.f32 %v185, %v246
    %248 = vdwg.mxu0
    %v249 = vmax.f32 %v245, 0.0
    %v250 = vmax.f32 %v247, 0.0
    %v251 = vand.u32 2147483647, %v245
    %v252 = vand.u32 2147483647, %v247
    %v253 = vsub.f32 0.0, %v251
    %v254 = vsub.f32 0.0, %v252
    %v255 = vmul.f32 %v253, 1.442695
    %v256 = vpow.pop %v255
    %v257 = vmul.f32 %v254, 1.442695
    %v258 = vpow.pop %v257
    %v259 = vadd.f32 %v256, 1.0
    %v260 = vlog2.pop %v259
    %v261 = vmul.f32 %v260, 0.6931472
    %v262 = vmul.f32 -0.5, %v256
    %v263 = vadd.f32 %v262, 1.0
    %v264 = vmul.f32 %v263, %v256
    %v265 = vand.u32 2147483647, %v256
    %vm266 = vcmp.lt.f32.partialorder %v265, 0.0004427343
    %v267 = vsel %vm266, %v264, %v261
    %v268 = vadd.f32 %v258, 1.0
    %v269 = vlog2.pop %v268
    %v270 = vmul.f32 %v269, 0.6931472
    %v271 = vmul.f32 -0.5, %v258
    %v272 = vadd.f32 %v271, 1.0
    %v273 = vmul.f32 %v272, %v258
    %v274 = vand.u32 2147483647, %v258
    %vm275 = vcmp.lt.f32.partialorder %v274, 0.0004427343
    %v276 = vsel %vm275, %v273, %v270
    %v277 = vadd.f32 %v249, %v267
    %v278 = vadd.f32 %v250, %v276
    %v279 = vpack.c.bf16 %v278, %v277
    %v280 = vld [vmem:[#allocation8] sm:$0xf]
    %v281 = vld [vmem:[#allocation8 + $0x4] sm:$0xf]
    %v282 = vld [vmem:[#allocation8 + $0x8] sm:$0xf]
    %v283 = vld [vmem:[#allocation8 + $0xc] sm:$0xf]
    %v284 = vld [vmem:[#allocation8 + $0x10] sm:$0xf]
    %v285 = vld [vmem:[#allocation8 + $0x14] sm:$0xf]
    %v286 = vld [vmem:[#allocation8 + $0x18] sm:$0xf]
    %v287 = vld [vmem:[#allocation8 + $0x1c] sm:$0xf]
    %v288 = vld [vmem:[#allocation8 + $0x20] sm:$0xf]
    %v289 = vld [vmem:[#allocation8 + $0x24] sm:$0xf]
    %v290 = vld [vmem:[#allocation8 + $0x28] sm:$0xf]
    %v291 = vld [vmem:[#allocation8 + $0x2c] sm:$0xf]
    %v292 = vld [vmem:[#allocation8 + $0x30] sm:$0xf]
    %v293 = vld [vmem:[#allocation8 + $0x34] sm:$0xf]
    %v294 = vld [vmem:[#allocation8 + $0x38] sm:$0xf]
    %v295 = vld [vmem:[#allocation8 + $0x3c] sm:$0xf]
    %v296 = vld [vmem:[%s6] sm:$0x1]
    %v298 = vperm.slane %v296, 0
    %v316 = vunpack.c.l.b16 %v280
    %v317 = vunpack.c.l.b16 %v281
    %v318 = vunpack.c.l.b16 %v282
    %v319 = vunpack.c.l.b16 %v283
    %v320 = vunpack.c.l.b16 %v284
    %v321 = vunpack.c.l.b16 %v285
    %v322 = vunpack.c.l.b16 %v286
    %v323 = vunpack.c.l.b16 %v287
    %v324 = vunpack.c.l.b16 %v288
    %v325 = vunpack.c.l.b16 %v289
    %v326 = vunpack.c.l.b16 %v290
    %v327 = vunpack.c.l.b16 %v291
    %v328 = vunpack.c.l.b16 %v292
    %v329 = vunpack.c.l.b16 %v293
    %v330 = vunpack.c.l.b16 %v294
    %v331 = vunpack.c.l.b16 %v295
    %v332 = vpack.c.b16 %v317, %v316
    %v333 = vpack.c.b16 %v319, %v318
    %v334 = vpack.c.b16 %v321, %v320
    %v335 = vpack.c.b16 %v323, %v322
    %v336 = vpack.c.b16 %v325, %v324
    %v337 = vpack.c.b16 %v327, %v326
    %v338 = vpack.c.b16 %v329, %v328
    %v339 = vpack.c.b16 %v331, %v330
    %348 = vmatpush.bf16.msra.mxu0 %v339
    %349 = vmatpush.bf16.msra.mxu0 %v338
    %350 = vmatpush.bf16.msra.mxu0 %v337
    %351 = vmatpush.bf16.msra.mxu0 %v336
    %352 = vmatpush.bf16.msra.mxu0 %v335
    %353 = vmatpush.bf16.msra.mxu0 %v334
    %354 = vmatpush.bf16.msra.mxu0 %v333
    %355 = vmatpush.bf16.msra.mxu0 %v332
    %356 = vmatmul.bf16.gmra.mxu0 %v279
    %v357 = vpop.f32.mrf.mxu0
    %v358 = vadd.f32 %v298, %v357
    %v359 = vpop.f32.mrf.mxu0
    %v360 = vadd.f32 %v298, %v359
    %361 = vdwg.mxu0
    %362 = vst [vmem:[#allocation10] sm:$0xff] %v358
    %363 = vst [vmem:[#allocation10 + $0x8] sm:$0xff] %v360
    // Predicated region
    $region46: #{tpu_custom_call.1} parent=1 // pred_check
      _
    $region47: #{tpu_custom_call.1} parent=1 // pred_check_branch
      %365 = sbr.rel (0) target = $region49
    $region48: #{tpu_custom_call.1} parent=1 // pred_region
      %367 = vsyncadd [#allocation4], 0
      %s368 = sshll.u32 [#allocation10], 4
      %s369 = int_to_ptr.vmem [resolvable:$true] %s368
      %s370 = sshll.u32 %s7, 4
      %s371 = int_to_ptr.hbm [resolvable:$true] %s370
      %376 = dma.vmem_to_hbm [thread:$0]  %s369, 256, %s371, [#allocation4], 128, 128, 8
    $region49: #{tpu_custom_call.1} parent=1 // pred_fallthru
      _
    // Predicated region
    $region50: #{tpu_custom_call.1} parent=1 // pred_check
      _
    $region51: #{tpu_custom_call.1} parent=1 // pred_check_branch
      %378 = sbr.rel (0) target = $region53
    $region52: #{tpu_custom_call.1} parent=1 // pred_region
      %380 = dma.done [#allocation4], 256
    $region53: #{tpu_custom_call.1} parent=1 // pred_fallthru
      _
    %381 = vsyncpa [#allocation3], 1
    %382 = vsyncpa [#allocation6], 1
    %383 = vsyncpa [#allocation9], 1
    %384 = vsyncpa [#allocation4], 1

</llo_original>
